<compile_context>
chip_gen: v6e
topology: v6e:2x2x1
jax: 0.10.0
libtpu: 0.0.40
codegen_flags: <defaults>
</compile_context>

<pallas_src>
import jax
import jax.numpy as jnp
from jax.experimental import pallas as pl
from jax.experimental.pallas import tpu as pltpu


def _identity_add_sub_kernel(dummy_ref, x_ref, o_ref):
    # dummy_ref: SMEM (1,) scalar parameter.
    # x_ref / o_ref: VMEM (TILE_R, LANES) tiles of the flattened input.
    d = dummy_ref[0]                      # scalar load, hoisted (no inner loop)
    o_ref[...] = (x_ref[...] + d) - d     # VPU elementwise; free under DMA


def i_forward(x, dummy):
    """EAGLE `I.forward`: x + dummy - dummy. x: any shape, dummy: (1,)."""
    orig_shape = x.shape
    total = 1
    for s in orig_shape:
        total *= int(s)
    itemsize = jnp.dtype(x.dtype).itemsize

    # Lane-dense layout and per-generation-safe tile sizing.
    LANES = 1024 if total >= 1024 else 128
    max_tile_rows = max(8, (2 * 1024 * 1024) // (LANES * itemsize))  # ~2 MiB/tile

    rows = pl.cdiv(total, LANES)
    if rows <= max_tile_rows:
        tile_rows = rows                   # single block == full array extent
        rows_padded = rows
    else:
        tile_rows = max_tile_rows          # multiple of 8 by construction
        rows_padded = pl.cdiv(rows, tile_rows) * tile_rows

    padded_total = rows_padded * LANES
    flat = x.reshape(-1)
    if padded_total != total:
        flat = jnp.pad(flat, (0, padded_total - total))
    x2 = flat.reshape(rows_padded, LANES)

    grid = (rows_padded // tile_rows,)

    out2 = pl.pallas_call(
        _identity_add_sub_kernel,
        out_shape=jax.ShapeDtypeStruct(x2.shape, x2.dtype),
        grid=grid,
        in_specs=[
            pl.BlockSpec(memory_space=pltpu.SMEM),                # dummy scalar
            pl.BlockSpec((tile_rows, LANES), lambda i: (i, 0)),   # streamed tiles
        ],
        out_specs=pl.BlockSpec((tile_rows, LANES), lambda i: (i, 0)),
        input_output_aliases={1: 0},   # reuse x2's HBM footprint for the output
        compiler_params=pltpu.CompilerParams(
            dimension_semantics=("parallel",),   # shard grid across TCs on v7x
            vmem_limit_bytes=32 * 1024 * 1024,   # explicit, safe on v5e/v6e/v7x
        ),
    )(dummy, x2)

    out_flat = out2.reshape(-1)
    if padded_total != total:
        out_flat = out_flat[:total]
    return out_flat.reshape(orig_shape)


if __name__ == "__main__":
    key = jax.random.PRNGKey(0)
    x = jax.random.normal(key, (2, 4, 16, 16), dtype=jnp.float32)

    # Deterministic parameter init, same as nn.Parameter(torch.ones(1)).
    dummy = jnp.ones((1,), dtype=jnp.float32)

    out = jax.block_until_ready(i_forward(x, dummy))

    # Reference: same expression as the PyTorch module (x + 1 - 1).
    ref = x + dummy[0] - dummy[0]
    assert out.shape == x.shape and out.dtype == x.dtype
    assert jnp.allclose(out, ref, atol=1e-6), "mismatch vs reference"

    print("KERNEL_OK")
</pallas_src>

<mosaic_0001>
module attributes {stable_mosaic.version = 11 : i64} {
  func.func @_identity_add_sub_kernel(%arg0: i32, %arg1: memref<1xf32, #tpu.memory_space<smem>>, %arg2: memref<2x1024xf32, #tpu.memory_space<vmem>>, %arg3: memref<2x1024xf32, #tpu.memory_space<vmem>>) attributes {dimension_semantics = [#tpu.dimension_semantics<parallel>], iteration_bounds = array<i64: 1>, scalar_prefetch = 0 : i64, scratch_operands = 0 : i64, tpu.core_type = #tpu.core_type<tc>, window_params = [{transform_indices = @transform_0, window_bounds = array<i64: 1>}, {transform_indices = @transform_1, window_bounds = array<i64: 2, 1024>}, {transform_indices = @transform_2, window_bounds = array<i64: 2, 1024>}]} {
    %c0 = arith.constant 0 : index
    %0 = memref.load %arg1[%c0] : memref<1xf32, #tpu.memory_space<smem>>
    %c0_0 = arith.constant 0 : index
    %c0_1 = arith.constant 0 : index
    %1 = vector.load %arg2[%c0_0, %c0_1] : memref<2x1024xf32, #tpu.memory_space<vmem>>, vector<2x1024xf32>
    %2 = vector.broadcast %0 : f32 to vector<2x1024xf32>
    %3 = arith.addf %1, %2 : vector<2x1024xf32>
    %4 = vector.broadcast %0 : f32 to vector<2x1024xf32>
    %5 = arith.subf %3, %4 : vector<2x1024xf32>
    %c0_2 = arith.constant 0 : index
    %c0_3 = arith.constant 0 : index
    %6 = vector.load %arg3[%c0_2, %c0_3] : memref<2x1024xf32, #tpu.memory_space<vmem>>, vector<2x1024xf32>
    tpu.vector_store %arg3[%c0_2, %c0_3], %5 {strides = array<i32>} : memref<2x1024xf32, #tpu.memory_space<vmem>>, vector<2x1024xf32>,
    return
  }
  func.func @transform_0(%arg0: i32) -> i32 {
    %c0_i32 = arith.constant 0 : i32
    %c0_i32_0 = arith.constant 0 : i32
    return %c0_i32 : i32
  }
  func.func @transform_1(%arg0: i32) -> (i32, i32) {
    %c0_i32 = arith.constant 0 : i32
    %c0_i32_0 = arith.constant 0 : i32
    return %arg0, %c0_i32 : i32, i32
  }
  func.func @transform_2(%arg0: i32) -> (i32, i32) {
    %c0_i32 = arith.constant 0 : i32
    %c0_i32_0 = arith.constant 0 : i32
    return %arg0, %c0_i32 : i32, i32
  }
}

</mosaic_0001>

<llo_original>
// kernel: tpu_custom_call.1
$region0: #{tpu_custom_call.1}
  #allocation0 [shape = 'u32[]', space=smem, size = 0x4, offset = 0x4, fixed_abs, tag = 'smem constant byte address 0x4 - core index']
  #allocation1 [shape = 'u32[144,128]{1,0:T(1,128)}', space=vmem, size = 0x12000, scoped, tag = 'internal scratch']
  #allocation2 [shape = 'f32[1]{0:T(128)S(6)}', space=smem, size = 0x200, scoped, tag = 'scoped memory for tpu_custom_call.1']
  %s0 = inlined_call_operand.<no memory space> [shape: f32[1], index: 0, kind: input, shape index: {}]
  %s1 = inlined_call_operand.hbm [shape: f32[2,1024], index: 1, kind: input, shape index: {}, may-alias: {1,2}]
  %s2 = inlined_call_operand.hbm [shape: f32[2,1024], index: 2, kind: output, shape index: {}, may-alias: {1,2}]
  %s3 = sld [smem:[#allocation0]]
  $region22: #{tpu_custom_call.1} parent=0
    _
  %s5 = ssub.s32 1, %s3
  %s6 = scalar_select 0, %s5, %s3
  %7 = sst [smem:[#allocation2]] %s0
  $region1: #{tpu_custom_call.1} parent=0
    #allocation3 [shape = 'u8[8192]{0}', space=vmem, size = 0x2000, scoped, tag = 'input window, operand 1, single buffered']
    #allocation4 [shape = 's32[1]{0}', space=sflag, size = 0x4, scoped, tag = 'scoped memory for tpu_custom_call.1']
    #allocation5 [shape = 's32[1]{0}', space=sflag, size = 0x4, scoped, tag = 'scoped memory for tpu_custom_call.1']
    #allocation6 [shape = 'u8[8192]{0}', space=vmem, size = 0x2000, scoped, tag = 'output window, operand 0, single buffered']
    %8 = vsyncpa [#allocation4], 0
    %9 = vsyncpa [#allocation5], 0
    // Predicated region
    $region2: #{tpu_custom_call.1} parent=1 // pred_check
      _
    $region3: #{tpu_custom_call.1} parent=1 // pred_check_branch
      %11 = sbr.rel (0) target = $region5
    $region4: #{tpu_custom_call.1} parent=1 // pred_region
      _
    $region5: #{tpu_custom_call.1} parent=1 // pred_fallthru
      _
    // Predicated region
    $region6: #{tpu_custom_call.1} parent=1 // pred_check
      _
    $region7: #{tpu_custom_call.1} parent=1 // pred_check_branch
      %13 = sbr.rel (0) target = $region9
    $region8: #{tpu_custom_call.1} parent=1 // pred_region
      %s15 = ssub.s32 256, 256
      %16 = vsyncadd [#allocation4], %s15
      %s18 = sshll.u32 [#allocation3], 4
      %s19 = int_to_ptr.vmem [resolvable:$true] %s18
      %21 = dma.hbm_to_vmem [thread:$0]  %s1, 256, %s19, [#allocation4]
    $region9: #{tpu_custom_call.1} parent=1 // pred_fallthru
      _
    // Predicated region
    $region10: #{tpu_custom_call.1} parent=1 // pred_check
      _
    $region11: #{tpu_custom_call.1} parent=1 // pred_check_branch
      %23 = sbr.rel (0) target = $region13
    $region12: #{tpu_custom_call.1} parent=1 // pred_region
      %24 = dma.done [#allocation4], 256
    $region13: #{tpu_custom_call.1} parent=1 // pred_fallthru
      _
    %s25 = sld [smem:[#allocation2]]
    %v26 = vld [vmem:[#allocation3] sm:$0xff]
    %v27 = vld [vmem:[#allocation3 + $0x8] sm:$0xff]
    %v28 = vstv %s25
    %v29 = vadd.f32 %v26, %v28
    %v30 = vadd.f32 %v27, %v28
    %v31 = vsub.f32 %v29, %v28
    %v32 = vsub.f32 %v30, %v28
    %33 = vst [vmem:[#allocation6] sm:$0xff] %v31
    %34 = vst [vmem:[#allocation6 + $0x8] sm:$0xff] %v32
    // Predicated region
    $region14: #{tpu_custom_call.1} parent=1 // pred_check
      _
    $region15: #{tpu_custom_call.1} parent=1 // pred_check_branch
      %36 = sbr.rel (0) target = $region17
    $region16: #{tpu_custom_call.1} parent=1 // pred_region
      %s38 = ssub.s32 256, 256
      %39 = vsyncadd [#allocation5], %s38
      %s41 = sshll.u32 [#allocation6], 4
      %s42 = int_to_ptr.vmem [resolvable:$true] %s41
      %44 = dma.vmem_to_hbm [thread:$0]  %s42, 256, %s2, [#allocation5]
    $region17: #{tpu_custom_call.1} parent=1 // pred_fallthru
      _
    // Predicated region
    $region18: #{tpu_custom_call.1} parent=1 // pred_check
      _
    $region19: #{tpu_custom_call.1} parent=1 // pred_check_branch
      %46 = sbr.rel (0) target = $region21
    $region20: #{tpu_custom_call.1} parent=1 // pred_region
      %47 = dma.done [#allocation5], 256
    $region21: #{tpu_custom_call.1} parent=1 // pred_fallthru
      _
    %48 = vsyncpa [#allocation4], 1
    %49 = vsyncpa [#allocation5], 1

</llo_original>
